<compile_context>
chip_gen: v5e
topology: v5e:2x2
jax: 0.10.0
libtpu: 0.0.40
codegen_flags: <defaults>
</compile_context>

<pallas_src>
import functools

import jax
import jax.numpy as jnp
from jax.experimental import pallas as pl
from jax.experimental.pallas import tpu as pltpu


# ----------------------------------------------------------------------------
# Pallas kernel.
#   h_t     = relu(x_t @ W_ih^T + b_ih + h_{t-1} @ W_hh^T + b_hh),  h_0 = 0
#   logits  = h_T @ W_cls^T + b_cls
# Grid axis 0 walks time-blocks of TBLK timesteps ("arbitrary": h is carried).
# ----------------------------------------------------------------------------
def rnn_classifier_kernel(x_ref,      # (TBLK*Bp, Ep) bf16  time-block of inputs
                          wih_ref,    # (Ep, Hp)      bf16  = W_ih^T (padded)
                          whh_ref,    # (Hp, Hp)      bf16  = W_hh^T (padded)
                          b_ref,      # (1, Hp)       f32   = b_ih + b_hh
                          wcls_ref,   # (Hp, Op)      bf16  = W_cls^T (padded)
                          bcls_ref,   # (1, Op)       f32   = b_cls
                          logits_ref, # (Bp, Op)      f32   output
                          h_scr,      # (Bp, Hp)      f32   persistent hidden state
                          xproj_scr,  # (TBLK*Bp, Hp) f32   staged x @ W_ih + b
                          *, n_chains, rem):
    t = pl.program_id(0)
    nt = pl.num_programs(0)

    bp, hp = h_scr.shape
    tblk = x_ref.shape[0] // bp
    cs = bp // n_chains

    @pl.when(t == 0)
    def _():
        h_scr[...] = jnp.zeros_like(h_scr)   # h_0 = 0 (PyTorch default)

    # Hoisted input projection for the whole time-block: one big bf16 MXU
    # matmul off the dependent chain, f32 accumulate, staged in VMEM scratch.
    xproj_scr[...] = (
        jnp.dot(x_ref[...], wih_ref[...], preferred_element_type=jnp.float32)
        + b_ref[...])

    w_hh = whh_ref[...]

    def run_steps(i_lo, i_hi, hs):
        # Statically unrolled latency-bound recurrence; n_chains independent
        # batch sub-chains interleaved per step to hide MXU result latency.
        for i in range(i_lo, i_hi):
            nxt = []
            for c in range(n_chains):
                r0 = i * bp + c * cs
                acc = jnp.dot(hs[c].astype(jnp.bfloat16), w_hh,
                              preferred_element_type=jnp.float32)
                nxt.append(jnp.maximum(acc + xproj_scr[r0:r0 + cs, :], 0.0))
            hs = nxt
        return hs

    # Steps that are valid in every time block.
    hs = [h_scr[c * cs:(c + 1) * cs, :] for c in range(n_chains)]
    hs = run_steps(0, rem, hs)
    for c in range(n_chains):
        h_scr[c * cs:(c + 1) * cs, :] = hs[c]

    if rem < tblk:  # static: the last block is time-padded
        @pl.when(t < nt - 1)
        def _():
            hs2 = [h_scr[c * cs:(c + 1) * cs, :] for c in range(n_chains)]
            hs2 = run_steps(rem, tblk, hs2)
            for c in range(n_chains):
                h_scr[c * cs:(c + 1) * cs, :] = hs2[c]

    # Finalize: classifier matmul only on the last time-block.
    @pl.when(t == nt - 1)
    def _():
        logits_ref[...] = (
            jnp.dot(h_scr[...].astype(jnp.bfloat16), wcls_ref[...],
                    preferred_element_type=jnp.float32) + bcls_ref[...])


def _round_up(x, m):
    return (x + m - 1) // m * m


def _pick_time_block(T, cap=32):
    # Prefer an exact divisor of T up to `cap`; if the best divisor is tiny
    # (e.g. prime T) use `cap` and let the kernel mask the padded tail of the
    # last block instead of falling off a tblk=1 cliff.
    cap = min(cap, T)
    best = 1
    for d in range(cap, 0, -1):
        if T % d == 0:
            best = d
            break
    if best * 2 >= cap:
        return best
    return cap


def run_rnn_classifier(x_tbe, w_ih_t, w_hh_t, b, w_cls_t, b_cls):
    T, B, E = x_tbe.shape
    H = w_hh_t.shape[0]
    O = w_cls_t.shape[1]

    # Pad to TPU-friendly tiles: B -> 16 (keeps bf16 (16,128) tiles aligned),
    # E/H/O -> 128 lanes.  Zero padding is exact: padded hidden lanes stay 0
    # through the ReLU recurrence; padded batch rows / output cols are sliced
    # off below (padded rows do accumulate relu(bias) but are never read).
    Bp = _round_up(B, 16)
    Ep = _round_up(E, 128)
    Hp = _round_up(H, 128)
    Op = _round_up(O, 128)

    tblk = _pick_time_block(T, cap=32)
    nt = -(-T // tblk)
    Tpad = nt * tblk
    rem = T - (nt - 1) * tblk          # real timesteps in the last block

    n_chains = 4 if (Bp % 32 == 0 and Bp >= 64) else 2

    # bf16 streamed input / weights; f32 biases.
    xp = (jnp.zeros((Tpad, Bp, Ep), jnp.bfloat16)
          .at[:T, :B, :E].set(x_tbe.astype(jnp.bfloat16))
          .reshape(Tpad * Bp, Ep))
    wih = jnp.zeros((Ep, Hp), jnp.bfloat16).at[:E, :H].set(
        w_ih_t.astype(jnp.bfloat16))
    whh = jnp.zeros((Hp, Hp), jnp.bfloat16).at[:H, :H].set(
        w_hh_t.astype(jnp.bfloat16))
    bb = jnp.zeros((1, Hp), jnp.float32).at[:, :H].set(b)
    wcls = jnp.zeros((Hp, Op), jnp.bfloat16).at[:H, :O].set(
        w_cls_t.astype(jnp.bfloat16))
    bcls = jnp.zeros((1, Op), jnp.float32).at[:, :O].set(b_cls)

    # Explicit VMEM budget: double-buffered x block + (double-buffered)
    # resident weights + scratch (hidden state, staged projection) + output.
    xblk_bytes = 2 * (tblk * Bp * Ep * 2)
    weight_bytes = 2 * ((Ep * Hp + Hp * Hp + Hp * Op) * 2 + (Hp + Op) * 4)
    scratch_bytes = Bp * Hp * 4 + tblk * Bp * Hp * 4
    out_bytes = 2 * Bp * Op * 4
    est = xblk_bytes + weight_bytes + scratch_bytes + out_bytes
    vmem_limit = int(min(max(2 * est + (2 << 20), 16 << 20), 64 << 20))

    flops = int(2 * T * Bp * (Ep + Hp) * Hp + 2 * Bp * Hp * Op)
    bytes_accessed = int(2 * Tpad * Bp * Ep
                         + 2 * (Ep * Hp + Hp * Hp + Hp * Op)
                         + 4 * (Hp + Op) + 4 * Bp * Op)

    kernel = functools.partial(rnn_classifier_kernel,
                               n_chains=n_chains, rem=rem)

    logits_p = pl.pallas_call(
        kernel,
        out_shape=jax.ShapeDtypeStruct((Bp, Op), jnp.float32),
        grid_spec=pltpu.PrefetchScalarGridSpec(
            num_scalar_prefetch=0,
            grid=(nt,),
            in_specs=[
                # x: one flattened time-block per grid step (auto double-
                # buffered DMA), lane-dense, no in-kernel reshape.
                pl.BlockSpec((tblk * Bp, Ep), lambda t: (t, 0)),
                # Weights / biases: constant index_map -> resident across grid.
                pl.BlockSpec((Ep, Hp), lambda t: (0, 0)),
                pl.BlockSpec((Hp, Hp), lambda t: (0, 0)),
                pl.BlockSpec((1, Hp), lambda t: (0, 0)),
                pl.BlockSpec((Hp, Op), lambda t: (0, 0)),
                pl.BlockSpec((1, Op), lambda t: (0, 0)),
            ],
            out_specs=pl.BlockSpec((Bp, Op), lambda t: (0, 0)),
            scratch_shapes=[
                pltpu.VMEM((Bp, Hp), jnp.float32),          # hidden state
                pltpu.VMEM((tblk * Bp, Hp), jnp.float32),   # staged x @ W_ih
            ],
        ),
        compiler_params=pltpu.CompilerParams(
            dimension_semantics=("arbitrary",),   # h carried across time
            vmem_limit_bytes=vmem_limit),
        cost_estimate=pl.CostEstimate(
            flops=flops, transcendentals=0, bytes_accessed=bytes_accessed),
    )(xp, wih, whh, bb, wcls, bcls)

    return logits_p[:B, :O]


# ----------------------------------------------------------------------------
# Model wrapper (glue: embedding gather, loss / acc on tiny (B, O) logits).
# ----------------------------------------------------------------------------
def init_params(key, vocab_size, embed_dim, hidden_dim, output_dim, padding_id):
    ks = jax.random.split(key, 6)
    emb = jax.random.normal(ks[0], (vocab_size, embed_dim), jnp.float32) * 0.1
    emb = emb.at[padding_id].set(0.0)  # padding_idx row is zero, like nn.Embedding
    scale_rnn = 1.0 / jnp.sqrt(hidden_dim)
    w_ih = jax.random.uniform(ks[1], (hidden_dim, embed_dim), jnp.float32,
                              -scale_rnn, scale_rnn)
    w_hh = jax.random.uniform(ks[2], (hidden_dim, hidden_dim), jnp.float32,
                              -scale_rnn, scale_rnn)
    b_ih = jax.random.uniform(ks[3], (hidden_dim,), jnp.float32,
                              -scale_rnn, scale_rnn)
    b_hh = jax.random.uniform(ks[4], (hidden_dim,), jnp.float32,
                              -scale_rnn, scale_rnn)
    scale_cls = 1.0 / jnp.sqrt(hidden_dim)
    w_cls = jax.random.uniform(ks[5], (output_dim, hidden_dim), jnp.float32,
                               -scale_cls, scale_cls)
    b_cls = jnp.zeros((output_dim,), jnp.float32)
    return dict(emb=emb, w_ih=w_ih, w_hh=w_hh, b_ih=b_ih, b_hh=b_hh,
                w_cls=w_cls, b_cls=b_cls)


@jax.jit
def forward(params, tokens, targets):
    # Embedding lookup directly in time-major layout (no extra HBM transpose).
    x_tbe = jnp.take(params["emb"], tokens.T, axis=0)         # (T, B, E)

    logits = run_rnn_classifier(
        x_tbe,
        jnp.transpose(params["w_ih"]),                        # (E, H)
        jnp.transpose(params["w_hh"]),                        # (H, H)
        (params["b_ih"] + params["b_hh"]).reshape(1, -1),     # (1, H)
        jnp.transpose(params["w_cls"]),                       # (H, O)
        params["b_cls"].reshape(1, -1),                       # (1, O)
    )                                                         # (B, O)

    # TODO(synk): CrossEntropyLoss / accuracy / embedding gather stay in JAX;
    # the RNN recurrence + classifier matmul run in the Pallas kernel.
    logz = jax.nn.log_softmax(logits, axis=-1)
    loss = -jnp.mean(jnp.take_along_axis(logz, targets[:, None], axis=-1))
    preds = jnp.argmax(logits, axis=-1)
    acc = jnp.sum(preds == targets).astype(jnp.float32) / logits.shape[0]
    return {"logits": logits, "loss": loss, "acc": acc}


if __name__ == "__main__":
    # Small shapes consistent with the module's forward.
    vocab_size, padding_id = 100, 0
    embed_dim, hidden_dim, output_dim = 32, 32, 4
    B, T = 2, 8

    key = jax.random.PRNGKey(0)
    k_param, k_tok, k_tgt = jax.random.split(key, 3)

    params = init_params(k_param, vocab_size, embed_dim, hidden_dim,
                         output_dim, padding_id)
    tokens = jax.random.randint(k_tok, (B, T), 1, vocab_size, jnp.int32)
    targets = jax.random.randint(k_tgt, (B,), 0, output_dim, jnp.int32)

    out = forward(params, tokens, targets)
    jax.block_until_ready(out)

    print("KERNEL_OK")
</pallas_src>

<mosaic_0001>
module attributes {stable_mosaic.version = 11 : i64} {
  func.func @rnn_classifier_kernel(%arg0: i32, %arg1: memref<128x128xbf16, #tpu.memory_space<vmem>>, %arg2: memref<128x128xbf16, #tpu.memory_space<vmem>>, %arg3: memref<128x128xbf16, #tpu.memory_space<vmem>>, %arg4: memref<1x128xf32, #tpu.memory_space<vmem>>, %arg5: memref<128x128xbf16, #tpu.memory_space<vmem>>, %arg6: memref<1x128xf32, #tpu.memory_space<vmem>>, %arg7: memref<16x128xf32, #tpu.memory_space<vmem>>, %arg8: memref<16x128xf32, #tpu.memory_space<vmem>>, %arg9: memref<128x128xf32, #tpu.memory_space<vmem>>) attributes {dimension_semantics = [#tpu.dimension_semantics<arbitrary>], iteration_bounds = array<i64: 1>, scalar_prefetch = 0 : i64, scratch_operands = 2 : i64, tpu.core_type = #tpu.core_type<tc>, window_params = [{transform_indices = @transform_0, window_bounds = array<i64: 128, 128>}, {pipeline_mode = #tpu.pipeline_mode<synchronous>, transform_indices = @transform_1, window_bounds = array<i64: 128, 128>}, {pipeline_mode = #tpu.pipeline_mode<synchronous>, transform_indices = @transform_2, window_bounds = array<i64: 128, 128>}, {pipeline_mode = #tpu.pipeline_mode<synchronous>, transform_indices = @transform_3, window_bounds = array<i64: 1, 128>}, {pipeline_mode = #tpu.pipeline_mode<synchronous>, transform_indices = @transform_4, window_bounds = array<i64: 128, 128>}, {pipeline_mode = #tpu.pipeline_mode<synchronous>, transform_indices = @transform_5, window_bounds = array<i64: 1, 128>}, {pipeline_mode = #tpu.pipeline_mode<synchronous>, transform_indices = @transform_6, window_bounds = array<i64: 16, 128>}]} {
    %c0_i32 = arith.constant 0 : i32
    %0 = arith.cmpi eq, %arg0, %c0_i32 : i32
    %1 = arith.extui %0 : i1 to i32
    %c0_i32_0 = arith.constant 0 : i32
    %2 = arith.cmpi ne, %1, %c0_i32_0 : i32
    scf.if %2 {
      %cst_69 = arith.constant 0.000000e+00 : f32
      %114 = vector.broadcast %cst_69 : f32 to vector<16x128xf32>
      %c0_70 = arith.constant 0 : index
      %c0_71 = arith.constant 0 : index
      %115 = vector.load %arg8[%c0_70, %c0_71] : memref<16x128xf32, #tpu.memory_space<vmem>>, vector<16x128xf32>
      tpu.vector_store %arg8[%c0_70, %c0_71], %114 {strides = array<i32>} : memref<16x128xf32, #tpu.memory_space<vmem>>, vector<16x128xf32>,
    } else {
    }
    %c0 = arith.constant 0 : index
    %c0_1 = arith.constant 0 : index
    %3 = vector.load %arg1[%c0, %c0_1] : memref<128x128xbf16, #tpu.memory_space<vmem>>, vector<128x128xbf16>
    %c0_2 = arith.constant 0 : index
    %c0_3 = arith.constant 0 : index
    %4 = vector.load %arg2[%c0_2, %c0_3] : memref<128x128xbf16, #tpu.memory_space<vmem>>, vector<128x128xbf16>
    %cst = arith.constant dense<0.000000e+00> : vector<128x128xf32>
    %5 = tpu.matmul %3, %4, %cst {dimension_numbers = #tpu.dot_dimension_numbers<[1], [0], [0], [1], [0, 0, 1, 1], [], []>} : vector<128x128xbf16>, vector<128x128xbf16>, vector<128x128xf32> -> vector<128x128xf32>
    %c0_4 = arith.constant 0 : index
    %c0_5 = arith.constant 0 : index
    %6 = vector.load %arg4[%c0_4, %c0_5] : memref<1x128xf32, #tpu.memory_space<vmem>>, vector<1x128xf32>
    %7 = vector.broadcast %6 : vector<1x128xf32> to vector<128x128xf32>
    %8 = arith.addf %5, %7 : vector<128x128xf32>
    %c0_6 = arith.constant 0 : index
    %c0_7 = arith.constant 0 : index
    %9 = vector.load %arg9[%c0_6, %c0_7] : memref<128x128xf32, #tpu.memory_space<vmem>>, vector<128x128xf32>
    tpu.vector_store %arg9[%c0_6, %c0_7], %8 {strides = array<i32>} : memref<128x128xf32, #tpu.memory_space<vmem>>, vector<128x128xf32>,
    %c0_8 = arith.constant 0 : index
    %c0_9 = arith.constant 0 : index
    %10 = vector.load %arg3[%c0_8, %c0_9] : memref<128x128xbf16, #tpu.memory_space<vmem>>, vector<128x128xbf16>
    %c0_10 = arith.constant 0 : index
    %c0_11 = arith.constant 0 : index
    %11 = vector.load %arg8[%c0_10, %c0_11] : memref<16x128xf32, #tpu.memory_space<vmem>>, vector<8x128xf32>
    %c8 = arith.constant 8 : index
    %c0_12 = arith.constant 0 : index
    %12 = vector.load %arg8[%c8, %c0_12] : memref<16x128xf32, #tpu.memory_space<vmem>>, vector<8x128xf32>
    %13 = arith.truncf %11 : vector<8x128xf32> to vector<8x128xbf16>
    %cst_13 = arith.constant dense<0.000000e+00> : vector<8x128xf32>
    %14 = tpu.matmul %13, %10, %cst_13 {dimension_numbers = #tpu.dot_dimension_numbers<[1], [0], [0], [1], [0, 0, 1, 1], [], []>} : vector<8x128xbf16>, vector<128x128xbf16>, vector<8x128xf32> -> vector<8x128xf32>
    %c0_14 = arith.constant 0 : index
    %c0_15 = arith.constant 0 : index
    %15 = vector.load %arg9[%c0_14, %c0_15] : memref<128x128xf32, #tpu.memory_space<vmem>>, vector<8x128xf32>
    %16 = arith.addf %14, %15 : vector<8x128xf32>
    %cst_16 = arith.constant 0.000000e+00 : f32
    %17 = vector.broadcast %cst_16 : f32 to vector<8x128xf32>
    %18 = arith.maximumf %16, %17 : vector<8x128xf32>
    %19 = arith.truncf %12 : vector<8x128xf32> to vector<8x128xbf16>
    %cst_17 = arith.constant dense<0.000000e+00> : vector<8x128xf32>
    %20 = tpu.matmul %19, %10, %cst_17 {dimension_numbers = #tpu.dot_dimension_numbers<[1], [0], [0], [1], [0, 0, 1, 1], [], []>} : vector<8x128xbf16>, vector<128x128xbf16>, vector<8x128xf32> -> vector<8x128xf32>
    %c8_18 = arith.constant 8 : index
    %c0_19 = arith.constant 0 : index
    %21 = vector.load %arg9[%c8_18, %c0_19] : memref<128x128xf32, #tpu.memory_space<vmem>>, vector<8x128xf32>
    %22 = arith.addf %20, %21 : vector<8x128xf32>
    %cst_20 = arith.constant 0.000000e+00 : f32
    %23 = vector.broadcast %cst_20 : f32 to vector<8x128xf32>
    %24 = arith.maximumf %22, %23 : vector<8x128xf32>
    %25 = arith.truncf %18 : vector<8x128xf32> to vector<8x128xbf16>
    %cst_21 = arith.constant dense<0.000000e+00> : vector<8x128xf32>
    %26 = tpu.matmul %25, %10, %cst_21 {dimension_numbers = #tpu.dot_dimension_numbers<[1], [0], [0], [1], [0, 0, 1, 1], [], []>} : vector<8x128xbf16>, vector<128x128xbf16>, vector<8x128xf32> -> vector<8x128xf32>
    %c16 = arith.constant 16 : index
    %c0_22 = arith.constant 0 : index
    %27 = vector.load %arg9[%c16, %c0_22] : memref<128x128xf32, #tpu.memory_space<vmem>>, vector<8x128xf32>
    %28 = arith.addf %26, %27 : vector<8x128xf32>
    %cst_23 = arith.constant 0.000000e+00 : f32
    %29 = vector.broadcast %cst_23 : f32 to vector<8x128xf32>
    %30 = arith.maximumf %28, %29 : vector<8x128xf32>
    %31 = arith.truncf %24 : vector<8x128xf32> to vector<8x128xbf16>
    %cst_24 = arith.constant dense<0.000000e+00> : vector<8x128xf32>
    %32 = tpu.matmul %31, %10, %cst_24 {dimension_numbers = #tpu.dot_dimension_numbers<[1], [0], [0], [1], [0, 0, 1, 1], [], []>} : vector<8x128xbf16>, vector<128x128xbf16>, vector<8x128xf32> -> vector<8x128xf32>
    %c24 = arith.constant 24 : index
    %c0_25 = arith.constant 0 : index
    %33 = vector.load %arg9[%c24, %c0_25] : memref<128x128xf32, #tpu.memory_space<vmem>>, vector<8x128xf32>
    %34 = arith.addf %32, %33 : vector<8x128xf32>
    %cst_26 = arith.constant 0.000000e+00 : f32
    %35 = vector.broadcast %cst_26 : f32 to vector<8x128xf32>
    %36 = arith.maximumf %34, %35 : vector<8x128xf32>
    %37 = arith.truncf %30 : vector<8x128xf32> to vector<8x128xbf16>
    %cst_27 = arith.constant dense<0.000000e+00> : vector<8x128xf32>
    %38 = tpu.matmul %37, %10, %cst_27 {dimension_numbers = #tpu.dot_dimension_numbers<[1], [0], [0], [1], [0, 0, 1, 1], [], []>} : vector<8x128xbf16>, vector<128x128xbf16>, vector<8x128xf32> -> vector<8x128xf32>
    %c32 = arith.constant 32 : index
    %c0_28 = arith.constant 0 : index
    %39 = vector.load %arg9[%c32, %c0_28] : memref<128x128xf32, #tpu.memory_space<vmem>>, vector<8x128xf32>
    %40 = arith.addf %38, %39 : vector<8x128xf32>
    %cst_29 = arith.constant 0.000000e+00 : f32
    %41 = vector.broadcast %cst_29 : f32 to vector<8x128xf32>
    %42 = arith.maximumf %40, %41 : vector<8x128xf32>
    %43 = arith.truncf %36 : vector<8x128xf32> to vector<8x128xbf16>
    %cst_30 = arith.constant dense<0.000000e+00> : vector<8x128xf32>
    %44 = tpu.matmul %43, %10, %cst_30 {dimension_numbers = #tpu.dot_dimension_numbers<[1], [0], [0], [1], [0, 0, 1, 1], [], []>} : vector<8x128xbf16>, vector<128x128xbf16>, vector<8x128xf32> -> vector<8x128xf32>
    %c40 = arith.constant 40 : index
    %c0_31 = arith.constant 0 : index
    %45 = vector.load %arg9[%c40, %c0_31] : memref<128x128xf32, #tpu.memory_space<vmem>>, vector<8x128xf32>
    %46 = arith.addf %44, %45 : vector<8x128xf32>
    %cst_32 = arith.constant 0.000000e+00 : f32
    %47 = vector.broadcast %cst_32 : f32 to vector<8x128xf32>
    %48 = arith.maximumf %46, %47 : vector<8x128xf32>
    %49 = arith.truncf %42 : vector<8x128xf32> to vector<8x128xbf16>
    %cst_33 = arith.constant dense<0.000000e+00> : vector<8x128xf32>
    %50 = tpu.matmul %49, %10, %cst_33 {dimension_numbers = #tpu.dot_dimension_numbers<[1], [0], [0], [1], [0, 0, 1, 1], [], []>} : vector<8x128xbf16>, vector<128x128xbf16>, vector<8x128xf32> -> vector<8x128xf32>
    %c48 = arith.constant 48 : index
    %c0_34 = arith.constant 0 : index
    %51 = vector.load %arg9[%c48, %c0_34] : memref<128x128xf32, #tpu.memory_space<vmem>>, vector<8x128xf32>
    %52 = arith.addf %50, %51 : vector<8x128xf32>
    %cst_35 = arith.constant 0.000000e+00 : f32
    %53 = vector.broadcast %cst_35 : f32 to vector<8x128xf32>
    %54 = arith.maximumf %52, %53 : vector<8x128xf32>
    %55 = arith.truncf %48 : vector<8x128xf32> to vector<8x128xbf16>
    %cst_36 = arith.constant dense<0.000000e+00> : vector<8x128xf32>
    %56 = tpu.matmul %55, %10, %cst_36 {dimension_numbers = #tpu.dot_dimension_numbers<[1], [0], [0], [1], [0, 0, 1, 1], [], []>} : vector<8x128xbf16>, vector<128x128xbf16>, vector<8x128xf32> -> vector<8x128xf32>
    %c56 = arith.constant 56 : index
    %c0_37 = arith.constant 0 : index
    %57 = vector.load %arg9[%c56, %c0_37] : memref<128x128xf32, #tpu.memory_space<vmem>>, vector<8x128xf32>
    %58 = arith.addf %56, %57 : vector<8x128xf32>
    %cst_38 = arith.constant 0.000000e+00 : f32
    %59 = vector.broadcast %cst_38 : f32 to vector<8x128xf32>
    %60 = arith.maximumf %58, %59 : vector<8x128xf32>
    %61 = arith.truncf %54 : vector<8x128xf32> to vector<8x128xbf16>
    %cst_39 = arith.constant dense<0.000000e+00> : vector<8x128xf32>
    %62 = tpu.matmul %61, %10, %cst_39 {dimension_numbers = #tpu.dot_dimension_numbers<[1], [0], [0], [1], [0, 0, 1, 1], [], []>} : vector<8x128xbf16>, vector<128x128xbf16>, vector<8x128xf32> -> vector<8x128xf32>
    %c64 = arith.constant 64 : index
    %c0_40 = arith.constant 0 : index
    %63 = vector.load %arg9[%c64, %c0_40] : memref<128x128xf32, #tpu.memory_space<vmem>>, vector<8x128xf32>
    %64 = arith.addf %62, %63 : vector<8x128xf32>
    %cst_41 = arith.constant 0.000000e+00 : f32
    %65 = vector.broadcast %cst_41 : f32 to vector<8x128xf32>
    %66 = arith.maximumf %64, %65 : vector<8x128xf32>
    %67 = arith.truncf %60 : vector<8x128xf32> to vector<8x128xbf16>
    %cst_42 = arith.constant dense<0.000000e+00> : vector<8x128xf32>
    %68 = tpu.matmul %67, %10, %cst_42 {dimension_numbers = #tpu.dot_dimension_numbers<[1], [0], [0], [1], [0, 0, 1, 1], [], []>} : vector<8x128xbf16>, vector<128x128xbf16>, vector<8x128xf32> -> vector<8x128xf32>
    %c72 = arith.constant 72 : index
    %c0_43 = arith.constant 0 : index
    %69 = vector.load %arg9[%c72, %c0_43] : memref<128x128xf32, #tpu.memory_space<vmem>>, vector<8x128xf32>
    %70 = arith.addf %68, %69 : vector<8x128xf32>
    %cst_44 = arith.constant 0.000000e+00 : f32
    %71 = vector.broadcast %cst_44 : f32 to vector<8x128xf32>
    %72 = arith.maximumf %70, %71 : vector<8x128xf32>
    %73 = arith.truncf %66 : vector<8x128xf32> to vector<8x128xbf16>
    %cst_45 = arith.constant dense<0.000000e+00> : vector<8x128xf32>
    %74 = tpu.matmul %73, %10, %cst_45 {dimension_numbers = #tpu.dot_dimension_numbers<[1], [0], [0], [1], [0, 0, 1, 1], [], []>} : vector<8x128xbf16>, vector<128x128xbf16>, vector<8x128xf32> -> vector<8x128xf32>
    %c80 = arith.constant 80 : index
    %c0_46 = arith.constant 0 : index
    %75 = vector.load %arg9[%c80, %c0_46] : memref<128x128xf32, #tpu.memory_space<vmem>>, vector<8x128xf32>
    %76 = arith.addf %74, %75 : vector<8x128xf32>
    %cst_47 = arith.constant 0.000000e+00 : f32
    %77 = vector.broadcast %cst_47 : f32 to vector<8x128xf32>
    %78 = arith.maximumf %76, %77 : vector<8x128xf32>
    %79 = arith.truncf %72 : vector<8x128xf32> to vector<8x128xbf16>
    %cst_48 = arith.constant dense<0.000000e+00> : vector<8x128xf32>
    %80 = tpu.matmul %79, %10, %cst_48 {dimension_numbers = #tpu.dot_dimension_numbers<[1], [0], [0], [1], [0, 0, 1, 1], [], []>} : vector<8x128xbf16>, vector<128x128xbf16>, vector<8x128xf32> -> vector<8x128xf32>
    %c88 = arith.constant 88 : index
    %c0_49 = arith.constant 0 : index
    %81 = vector.load %arg9[%c88, %c0_49] : memref<128x128xf32, #tpu.memory_space<vmem>>, vector<8x128xf32>
    %82 = arith.addf %80, %81 : vector<8x128xf32>
    %cst_50 = arith.constant 0.000000e+00 : f32
    %83 = vector.broadcast %cst_50 : f32 to vector<8x128xf32>
    %84 = arith.maximumf %82, %83 : vector<8x128xf32>
    %85 = arith.truncf %78 : vector<8x128xf32> to vector<8x128xbf16>
    %cst_51 = arith.constant dense<0.000000e+00> : vector<8x128xf32>
    %86 = tpu.matmul %85, %10, %cst_51 {dimension_numbers = #tpu.dot_dimension_numbers<[1], [0], [0], [1], [0, 0, 1, 1], [], []>} : vector<8x128xbf16>, vector<128x128xbf16>, vector<8x128xf32> -> vector<8x128xf32>
    %c96 = arith.constant 96 : index
    %c0_52 = arith.constant 0 : index
    %87 = vector.load %arg9[%c96, %c0_52] : memref<128x128xf32, #tpu.memory_space<vmem>>, vector<8x128xf32>
    %88 = arith.addf %86, %87 : vector<8x128xf32>
    %cst_53 = arith.constant 0.000000e+00 : f32
    %89 = vector.broadcast %cst_53 : f32 to vector<8x128xf32>
    %90 = arith.maximumf %88, %89 : vector<8x128xf32>
    %91 = arith.truncf %84 : vector<8x128xf32> to vector<8x128xbf16>
    %cst_54 = arith.constant dense<0.000000e+00> : vector<8x128xf32>
    %92 = tpu.matmul %91, %10, %cst_54 {dimension_numbers = #tpu.dot_dimension_numbers<[1], [0], [0], [1], [0, 0, 1, 1], [], []>} : vector<8x128xbf16>, vector<128x128xbf16>, vector<8x128xf32> -> vector<8x128xf32>
    %c104 = arith.constant 104 : index
    %c0_55 = arith.constant 0 : index
    %93 = vector.load %arg9[%c104, %c0_55] : memref<128x128xf32, #tpu.memory_space<vmem>>, vector<8x128xf32>
    %94 = arith.addf %92, %93 : vector<8x128xf32>
    %cst_56 = arith.constant 0.000000e+00 : f32
    %95 = vector.broadcast %cst_56 : f32 to vector<8x128xf32>
    %96 = arith.maximumf %94, %95 : vector<8x128xf32>
    %97 = arith.truncf %90 : vector<8x128xf32> to vector<8x128xbf16>
    %cst_57 = arith.constant dense<0.000000e+00> : vector<8x128xf32>
    %98 = tpu.matmul %97, %10, %cst_57 {dimension_numbers = #tpu.dot_dimension_numbers<[1], [0], [0], [1], [0, 0, 1, 1], [], []>} : vector<8x128xbf16>, vector<128x128xbf16>, vector<8x128xf32> -> vector<8x128xf32>
    %c112 = arith.constant 112 : index
    %c0_58 = arith.constant 0 : index
    %99 = vector.load %arg9[%c112, %c0_58] : memref<128x128xf32, #tpu.memory_space<vmem>>, vector<8x128xf32>
    %100 = arith.addf %98, %99 : vector<8x128xf32>
    %cst_59 = arith.constant 0.000000e+00 : f32
    %101 = vector.broadcast %cst_59 : f32 to vector<8x128xf32>
    %102 = arith.maximumf %100, %101 : vector<8x128xf32>
    %103 = arith.truncf %96 : vector<8x128xf32> to vector<8x128xbf16>
    %cst_60 = arith.constant dense<0.000000e+00> : vector<8x128xf32>
    %104 = tpu.matmul %103, %10, %cst_60 {dimension_numbers = #tpu.dot_dimension_numbers<[1], [0], [0], [1], [0, 0, 1, 1], [], []>} : vector<8x128xbf16>, vector<128x128xbf16>, vector<8x128xf32> -> vector<8x128xf32>
    %c120 = arith.constant 120 : index
    %c0_61 = arith.constant 0 : index
    %105 = vector.load %arg9[%c120, %c0_61] : memref<128x128xf32, #tpu.memory_space<vmem>>, vector<8x128xf32>
    %106 = arith.addf %104, %105 : vector<8x128xf32>
    %cst_62 = arith.constant 0.000000e+00 : f32
    %107 = vector.broadcast %cst_62 : f32 to vector<8x128xf32>
    %108 = arith.maximumf %106, %107 : vector<8x128xf32>
    %c0_63 = arith.constant 0 : index
    %c0_64 = arith.constant 0 : index
    %109 = vector.load %arg8[%c0_63, %c0_64] : memref<16x128xf32, #tpu.memory_space<vmem>>, vector<8x128xf32>
    tpu.vector_store %arg8[%c0_63, %c0_64], %102 {strides = array<i32>} : memref<16x128xf32, #tpu.memory_space<vmem>>, vector<8x128xf32>,
    %c8_65 = arith.constant 8 : index
    %c0_66 = arith.constant 0 : index
    %110 = vector.load %arg8[%c8_65, %c0_66] : memref<16x128xf32, #tpu.memory_space<vmem>>, vector<8x128xf32>
    tpu.vector_store %arg8[%c8_65, %c0_66], %108 {strides = array<i32>} : memref<16x128xf32, #tpu.memory_space<vmem>>, vector<8x128xf32>,
    %c0_i32_67 = arith.constant 0 : i32
    %111 = arith.cmpi eq, %arg0, %c0_i32_67 : i32
    %112 = arith.extui %111 : i1 to i32
    %c0_i32_68 = arith.constant 0 : i32
    %113 = arith.cmpi ne, %112, %c0_i32_68 : i32
    scf.if %113 {
      %c0_69 = arith.constant 0 : index
      %c0_70 = arith.constant 0 : index
      %114 = vector.load %arg8[%c0_69, %c0_70] : memref<16x128xf32, #tpu.memory_space<vmem>>, vector<16x128xf32>
      %115 = arith.truncf %114 : vector<16x128xf32> to vector<16x128xbf16>
      %c0_71 = arith.constant 0 : index
      %c0_72 = arith.constant 0 : index
      %116 = vector.load %arg5[%c0_71, %c0_72] : memref<128x128xbf16, #tpu.memory_space<vmem>>, vector<128x128xbf16>
      %cst_73 = arith.constant dense<0.000000e+00> : vector<16x128xf32>
      %117 = tpu.matmul %115, %116, %cst_73 {dimension_numbers = #tpu.dot_dimension_numbers<[1], [0], [0], [1], [0, 0, 1, 1], [], []>} : vector<16x128xbf16>, vector<128x128xbf16>, vector<16x128xf32> -> vector<16x128xf32>
      %c0_74 = arith.constant 0 : index
      %c0_75 = arith.constant 0 : index
      %118 = vector.load %arg6[%c0_74, %c0_75] : memref<1x128xf32, #tpu.memory_space<vmem>>, vector<1x128xf32>
      %119 = vector.broadcast %118 : vector<1x128xf32> to vector<16x128xf32>
      %120 = arith.addf %117, %119 : vector<16x128xf32>
      %c0_76 = arith.constant 0 : index
      %c0_77 = arith.constant 0 : index
      %121 = vector.load %arg7[%c0_76, %c0_77] : memref<16x128xf32, #tpu.memory_space<vmem>>, vector<16x128xf32>
      tpu.vector_store %arg7[%c0_76, %c0_77], %120 {strides = array<i32>} : memref<16x128xf32, #tpu.memory_space<vmem>>, vector<16x128xf32>,
    } else {
    }
    return
  }
  func.func @transform_0(%arg0: i32) -> (i32, i32) {
    %c0_i32 = arith.constant 0 : i32
    %c0_i32_0 = arith.constant 0 : i32
    return %arg0, %c0_i32 : i32, i32
  }
  func.func @transform_1(%arg0: i32) -> (i32, i32) {
    %c0_i32 = arith.constant 0 : i32
    %c0_i32_0 = arith.constant 0 : i32
    %c0_i32_1 = arith.constant 0 : i32
    return %c0_i32, %c0_i32_0 : i32, i32
  }
  func.func @transform_2(%arg0: i32) -> (i32, i32) {
    %c0_i32 = arith.constant 0 : i32
    %c0_i32_0 = arith.constant 0 : i32
    %c0_i32_1 = arith.constant 0 : i32
    return %c0_i32, %c0_i32_0 : i32, i32
  }
  func.func @transform_3(%arg0: i32) -> (i32, i32) {
    %c0_i32 = arith.constant 0 : i32
    %c0_i32_0 = arith.constant 0 : i32
    %c0_i32_1 = arith.constant 0 : i32
    return %c0_i32, %c0_i32_0 : i32, i32
  }
  func.func @transform_4(%arg0: i32) -> (i32, i32) {
    %c0_i32 = arith.constant 0 : i32
    %c0_i32_0 = arith.constant 0 : i32
    %c0_i32_1 = arith.constant 0 : i32
    return %c0_i32, %c0_i32_0 : i32, i32
  }
  func.func @transform_5(%arg0: i32) -> (i32, i32) {
    %c0_i32 = arith.constant 0 : i32
    %c0_i32_0 = arith.constant 0 : i32
    %c0_i32_1 = arith.constant 0 : i32
    return %c0_i32, %c0_i32_0 : i32, i32
  }
  func.func @transform_6(%arg0: i32) -> (i32, i32) {
    %c0_i32 = arith.constant 0 : i32
    %c0_i32_0 = arith.constant 0 : i32
    %c0_i32_1 = arith.constant 0 : i32
    return %c0_i32, %c0_i32_0 : i32, i32
  }
}

</mosaic_0001>

<llo_original>
// kernel: forward.1
$region0: #{forward.1}
  #allocation0 [shape = 'u32[]', space=smem, size = 0x4, offset = 0x4, fixed_abs, tag = 'smem constant byte address 0x4 - core index']
  #allocation1 [shape = 'u32[72,128]{1,0:T(1,128)}', space=vmem, size = 0x9000, scoped, tag = 'internal scratch']
  #allocation2 [shape = 'f32[16,128]{1,0:T(8,128)}', space=vmem, size = 0x2000, scoped, tag = 'scratch operand']
  #allocation3 [shape = 'f32[128,128]{1,0:T(8,128)}', space=vmem, size = 0x10000, scoped, tag = 'scratch operand']
  %s0 = inlined_call_operand.vmem [shape: bf16[128,128], index: 0, kind: input, shape index: {}]
  %s1 = inlined_call_operand.vmem [shape: bf16[128,128], index: 1, kind: input, shape index: {}]
  %s2 = inlined_call_operand.vmem [shape: bf16[128,128], index: 2, kind: input, shape index: {}]
  %s3 = inlined_call_operand.vmem [shape: f32[1,128], index: 3, kind: input, shape index: {}]
  %s4 = inlined_call_operand.vmem [shape: bf16[128,128], index: 4, kind: input, shape index: {}]
  %s5 = inlined_call_operand.vmem [shape: f32[1,128], index: 5, kind: input, shape index: {}]
  %s6 = inlined_call_operand.vmem [shape: f32[16,128], index: 6, kind: output, shape index: {}]
  %s7 = sld [smem:[#allocation0]]
  $region42: #{forward.1} parent=0
    _
  %s9 = ssub.s32 1, %s7
  %s10 = scalar_select 0, %s9, %s7
  // Predicated region
  $region2: #{forward.1} parent=0 // pred_check
    _
  $region3: #{forward.1} parent=0 // pred_check_branch
    %12 = sbr.rel (0) target = $region5
  $region4: #{forward.1} parent=0 // pred_region
    _
  $region5: #{forward.1} parent=0 // pred_fallthru
    _
  // Predicated region
  $region6: #{forward.1} parent=0 // pred_check
    _
  $region7: #{forward.1} parent=0 // pred_check_branch
    %14 = sbr.rel (0) target = $region9
  $region8: #{forward.1} parent=0 // pred_region
    _
  $region9: #{forward.1} parent=0 // pred_fallthru
    _
  // Predicated region
  $region10: #{forward.1} parent=0 // pred_check
    _
  $region11: #{forward.1} parent=0 // pred_check_branch
    %16 = sbr.rel (0) target = $region13
  $region12: #{forward.1} parent=0 // pred_region
    _
  $region13: #{forward.1} parent=0 // pred_fallthru
    _
  // Predicated region
  $region14: #{forward.1} parent=0 // pred_check
    _
  $region15: #{forward.1} parent=0 // pred_check_branch
    %18 = sbr.rel (0) target = $region17
  $region16: #{forward.1} parent=0 // pred_region
    _
  $region17: #{forward.1} parent=0 // pred_fallthru
    _
  // Predicated region
  $region18: #{forward.1} parent=0 // pred_check
    _
  $region19: #{forward.1} parent=0 // pred_check_branch
    %20 = sbr.rel (0) target = $region21
  $region20: #{forward.1} parent=0 // pred_region
    _
  $region21: #{forward.1} parent=0 // pred_fallthru
    _
  // Predicated region
  $region22: #{forward.1} parent=0 // pred_check
    _
  $region23: #{forward.1} parent=0 // pred_check_branch
    %22 = sbr.rel (0) target = $region25
  $region24: #{forward.1} parent=0 // pred_region
    _
  $region25: #{forward.1} parent=0 // pred_fallthru
    _
  %p23 = scmp.eq.s32.totalorder 0, 0
  // Predicated region
  $region26: #{forward.1} parent=0 // pred_check
    %p24 = pneg %p23
  $region27: #{forward.1} parent=0 // pred_check_branch
    %26 = sbr.rel (%p24) target = $region29
  $region28: #{forward.1} parent=0 // pred_region
    %27 = vst [vmem:[#allocation2] sm:$0xff] 0.0
    %28 = vst [vmem:[#allocation2 + $0x8] sm:$0xff] 0.0
  $region29: #{forward.1} parent=0 // pred_fallthru
    _
  %v29 = vld [vmem:[%s0] sm:$0xf]
  %v30 = vld [vmem:[%s0 + $0x4] sm:$0xf]
  %v31 = vld [vmem:[%s0 + $0x8] sm:$0xf]
  %v32 = vld [vmem:[%s0 + $0xc] sm:$0xf]
  %v33 = vld [vmem:[%s0 + $0x10] sm:$0xf]
  %v34 = vld [vmem:[%s0 + $0x14] sm:$0xf]
  %v35 = vld [vmem:[%s0 + $0x18] sm:$0xf]
  %v36 = vld [vmem:[%s0 + $0x1c] sm:$0xf]
  %v37 = vld [vmem:[%s0 + $0x20] sm:$0xf]
  %v38 = vld [vmem:[%s0 + $0x24] sm:$0xf]
  %v39 = vld [vmem:[%s0 + $0x28] sm:$0xf]
  %v40 = vld [vmem:[%s0 + $0x2c] sm:$0xf]
  %v41 = vld [vmem:[%s0 + $0x30] sm:$0xf]
  %v42 = vld [vmem:[%s0 + $0x34] sm:$0xf]
  %v43 = vld [vmem:[%s0 + $0x38] sm:$0xf]
  %v44 = vld [vmem:[%s0 + $0x3c] sm:$0xf]
  %v45 = vld [vmem:[%s1] sm:$0xf]
  %v46 = vld [vmem:[%s1 + $0x4] sm:$0xf]
  %v47 = vld [vmem:[%s1 + $0x8] sm:$0xf]
  %v48 = vld [vmem:[%s1 + $0xc] sm:$0xf]
  %v49 = vld [vmem:[%s1 + $0x10] sm:$0xf]
  %v50 = vld [vmem:[%s1 + $0x14] sm:$0xf]
  %v51 = vld [vmem:[%s1 + $0x18] sm:$0xf]
  %v52 = vld [vmem:[%s1 + $0x1c] sm:$0xf]
  %v53 = vld [vmem:[%s1 + $0x20] sm:$0xf]
  %v54 = vld [vmem:[%s1 + $0x24] sm:$0xf]
  %v55 = vld [vmem:[%s1 + $0x28] sm:$0xf]
  %v56 = vld [vmem:[%s1 + $0x2c] sm:$0xf]
  %v57 = vld [vmem:[%s1 + $0x30] sm:$0xf]
  %v58 = vld [vmem:[%s1 + $0x34] sm:$0xf]
  %v59 = vld [vmem:[%s1 + $0x38] sm:$0xf]
  %v60 = vld [vmem:[%s1 + $0x3c] sm:$0xf]
  %v61 = vld [vmem:[%s3] sm:$0x1]
  %v63 = vperm.slane %v61, 0
  %v81 = vunpack.c.l.b16 %v29
  %v82 = vunpack.c.l.b16 %v30
  %v83 = vunpack.c.l.b16 %v31
  %v84 = vunpack.c.l.b16 %v32
  %v85 = vunpack.c.l.b16 %v33
  %v86 = vunpack.c.l.b16 %v34
  %v87 = vunpack.c.l.b16 %v35
  %v88 = vunpack.c.l.b16 %v36
  %v89 = vunpack.c.l.b16 %v37
  %v90 = vunpack.c.l.b16 %v38
  %v91 = vunpack.c.l.b16 %v39
  %v92 = vunpack.c.l.b16 %v40
  %v93 = vunpack.c.l.b16 %v41
  %v94 = vunpack.c.l.b16 %v42
  %v95 = vunpack.c.l.b16 %v43
  %v96 = vunpack.c.l.b16 %v44
  %v97 = vpack.c.b16 %v82, %v81
  %v98 = vpack.c.b16 %v84, %v83
  %v99 = vpack.c.b16 %v86, %v85
  %v100 = vpack.c.b16 %v88, %v87
  %v101 = vpack.c.b16 %v90, %v89
  %v102 = vpack.c.b16 %v92, %v91
  %v103 = vpack.c.b16 %v94, %v93
  %v104 = vpack.c.b16 %v96, %v95
  %v129 = vunpack.c.l.b16 %v45
  %v130 = vunpack.c.l.b16 %v46
  %v131 = vunpack.c.l.b16 %v47
  %v132 = vunpack.c.l.b16 %v48
  %v133 = vunpack.c.l.b16 %v49
  %v134 = vunpack.c.l.b16 %v50
  %v135 = vunpack.c.l.b16 %v51
  %v136 = vunpack.c.l.b16 %v52
  %v137 = vunpack.c.l.b16 %v53
  %v138 = vunpack.c.l.b16 %v54
  %v139 = vunpack.c.l.b16 %v55
  %v140 = vunpack.c.l.b16 %v56
  %v141 = vunpack.c.l.b16 %v57
  %v142 = vunpack.c.l.b16 %v58
  %v143 = vunpack.c.l.b16 %v59
  %v144 = vunpack.c.l.b16 %v60
  %v145 = vpack.c.b16 %v130, %v129
  %v146 = vpack.c.b16 %v132, %v131
  %v147 = vpack.c.b16 %v134, %v133
  %v148 = vpack.c.b16 %v136, %v135
  %v149 = vpack.c.b16 %v138, %v137
  %v150 = vpack.c.b16 %v140, %v139
  %v151 = vpack.c.b16 %v142, %v141
  %v152 = vpack.c.b16 %v144, %v143
  %161 = vmatpush.bf16.msra.mxu0 %v152
  %162 = vmatpush.bf16.msra.mxu0 %v151
  %163 = vmatpush.bf16.msra.mxu0 %v150
  %164 = vmatpush.bf16.msra.mxu0 %v149
  %165 = vmatpush.bf16.msra.mxu0 %v148
  %166 = vmatpush.bf16.msra.mxu0 %v147
  %167 = vmatpush.bf16.msra.mxu0 %v146
  %168 = vmatpush.bf16.msra.mxu0 %v145
  %169 = vmatmul.bf16.gmra.mxu0 %v97
  %v170 = vpop.f32.mrf.mxu0
  %v171 = vadd.f32 %v63, %v170
  %v172 = vpop.f32.mrf.mxu0
  %v173 = vadd.f32 %v63, %v172
  %174 = vmatmul.bf16.gmra.mxu0 %v98
  %v175 = vpop.f32.mrf.mxu0
  %v176 = vadd.f32 %v63, %v175
  %v177 = vpop.f32.mrf.mxu0
  %v178 = vadd.f32 %v63, %v177
  %179 = vmatmul.bf16.gmra.mxu0 %v99
  %v180 = vpop.f32.mrf.mxu0
  %v181 = vadd.f32 %v63, %v180
  %v182 = vpop.f32.mrf.mxu0
  %v183 = vadd.f32 %v63, %v182
  %184 = vmatmul.bf16.gmra.mxu0 %v100
  %v185 = vpop.f32.mrf.mxu0
  %v186 = vadd.f32 %v63, %v185
  %v187 = vpop.f32.mrf.mxu0
  %v188 = vadd.f32 %v63, %v187
  %189 = vmatmul.bf16.gmra.mxu0 %v101
  %v190 = vpop.f32.mrf.mxu0
  %v191 = vadd.f32 %v63, %v190
  %v192 = vpop.f32.mrf.mxu0
  %v193 = vadd.f32 %v63, %v192
  %194 = vmatmul.bf16.gmra.mxu0 %v102
  %v195 = vpop.f32.mrf.mxu0
  %v196 = vadd.f32 %v63, %v195
  %v197 = vpop.f32.mrf.mxu0
  %v198 = vadd.f32 %v63, %v197
  %199 = vmatmul.bf16.gmra.mxu0 %v103
  %v200 = vpop.f32.mrf.mxu0
  %v201 = vadd.f32 %v63, %v200
  %v202 = vpop.f32.mrf.mxu0
  %v203 = vadd.f32 %v63, %v202
  %204 = vmatmul.bf16.gmra.mxu0 %v104
  %v205 = vpop.f32.mrf.mxu0
  %v206 = vadd.f32 %v63, %v205
  %v207 = vpop.f32.mrf.mxu0
  %v208 = vadd.f32 %v63, %v207
  %209 = vdwg.mxu0
  %210 = vst [vmem:[#allocation3] sm:$0xff] %v171
  %211 = vst [vmem:[#allocation3 + $0x8] sm:$0xff] %v173
  %212 = vst [vmem:[#allocation3 + $0x10] sm:$0xff] %v176
  %213 = vst [vmem:[#allocation3 + $0x18] sm:$0xff] %v178
  %214 = vst [vmem:[#allocation3 + $0x20] sm:$0xff] %v181
  %215 = vst [vmem:[#allocation3 + $0x28] sm:$0xff] %v183
  %216 = vst [vmem:[#allocation3 + $0x30] sm:$0xff] %v186
  %217 = vst [vmem:[#allocation3 + $0x38] sm:$0xff] %v188
  %218 = vst [vmem:[#allocation3 + $0x40] sm:$0xff] %v191
  %219 = vst [vmem:[#allocation3 + $0x48] sm:$0xff] %v193
  %220 = vst [vmem:[#allocation3 + $0x50] sm:$0xff] %v196
  %221 = vst [vmem:[#allocation3 + $0x58] sm:$0xff] %v198
  %222 = vst [vmem:[#allocation3 + $0x60] sm:$0xff] %v201
  %223 = vst [vmem:[#allocation3 + $0x68] sm:$0xff] %v203
  %224 = vst [vmem:[#allocation3 + $0x70] sm:$0xff] %v206
  %225 = vst [vmem:[#allocation3 + $0x78] sm:$0xff] %v208
  %v226 = vld [vmem:[%s2] sm:$0xf]
  %v227 = vld [vmem:[%s2 + $0x4] sm:$0xf]
  %v228 = vld [vmem:[%s2 + $0x8] sm:$0xf]
  %v229 = vld [vmem:[%s2 + $0xc] sm:$0xf]
  %v230 = vld [vmem:[%s2 + $0x10] sm:$0xf]
  %v231 = vld [vmem:[%s2 + $0x14] sm:$0xf]
  %v232 = vld [vmem:[%s2 + $0x18] sm:$0xf]
  %v233 = vld [vmem:[%s2 + $0x1c] sm:$0xf]
  %v234 = vld [vmem:[%s2 + $0x20] sm:$0xf]
  %v235 = vld [vmem:[%s2 + $0x24] sm:$0xf]
  %v236 = vld [vmem:[%s2 + $0x28] sm:$0xf]
  %v237 = vld [vmem:[%s2 + $0x2c] sm:$0xf]
  %v238 = vld [vmem:[%s2 + $0x30] sm:$0xf]
  %v239 = vld [vmem:[%s2 + $0x34] sm:$0xf]
  %v240 = vld [vmem:[%s2 + $0x38] sm:$0xf]
  %v241 = vld [vmem:[%s2 + $0x3c] sm:$0xf]
  %v242 = vld [vmem:[#allocation2] sm:$0xff]
  %v243 = vld [vmem:[#allocation2 + $0x8] sm:$0xff]
  %v244 = vpack.c.bf16 %v242, %v242
  %v245 = vld [vmem:[#allocation3] sm:$0xff]
  %v262 = vunpack.c.l.b16 %v226
  %v263 = vunpack.c.l.b16 %v227
  %v264 = vunpack.c.l.b16 %v228
  %v265 = vunpack.c.l.b16 %v229
  %v266 = vunpack.c.l.b16 %v230
  %v267 = vunpack.c.l.b16 %v231
  %v268 = vunpack.c.l.b16 %v232
  %v269 = vunpack.c.l.b16 %v233
  %v270 = vunpack.c.l.b16 %v234
  %v271 = vunpack.c.l.b16 %v235
  %v272 = vunpack.c.l.b16 %v236
  %v273 = vunpack.c.l.b16 %v237
  %v274 = vunpack.c.l.b16 %v238
  %v275 = vunpack.c.l.b16 %v239
  %v276 = vunpack.c.l.b16 %v240
  %v277 = vunpack.c.l.b16 %v241
  %v278 = vpack.c.b16 %v263, %v262
  %v279 = vpack.c.b16 %v265, %v264
  %v280 = vpack.c.b16 %v267, %v266
  %v281 = vpack.c.b16 %v269, %v268
  %v282 = vpack.c.b16 %v271, %v270
  %v283 = vpack.c.b16 %v273, %v272
  %v284 = vpack.c.b16 %v275, %v274
  %v285 = vpack.c.b16 %v277, %v276
  %294 = vmatpush.bf16.msra.mxu0 %v285
  %295 = vmatpush.bf16.msra.mxu0 %v284
  %296 = vmatpush.bf16.msra.mxu0 %v283
  %297 = vmatpush.bf16.msra.mxu0 %v282
  %298 = vmatpush.bf16.msra.mxu0 %v281
  %299 = vmatpush.bf16.msra.mxu0 %v280
  %300 = vmatpush.bf16.msra.mxu0 %v279
  %301 = vmatpush.bf16.msra.mxu0 %v278
  %302 = vmatmul.bf16.gmra.mxu0 %v244
  %v303 = vpop.f32.mrf.mxu0
  %v304 = vadd.f32 %v245, %v303
  %v305 = vpop.f32.mrf.mxu0
  %306 = vdwg.mxu0
  %v307 = vmax.f32 %v304, 0.0
  %v308 = vpack.c.bf16 %v243, %v243
  %v309 = vld [vmem:[#allocation3 + $0x8] sm:$0xff]
  %310 = vmatpush.bf16.msra.mxu0 %v285
  %311 = vmatpush.bf16.msra.mxu0 %v284
  %312 = vmatpush.bf16.msra.mxu0 %v283
  %313 = vmatpush.bf16.msra.mxu0 %v282
  %314 = vmatpush.bf16.msra.mxu0 %v281
  %315 = vmatpush.bf16.msra.mxu0 %v280
  %316 = vmatpush.bf16.msra.mxu0 %v279
  %317 = vmatpush.bf16.msra.mxu0 %v278
  %318 = vmatmul.bf16.gmra.mxu0 %v308
  %v319 = vpop.f32.mrf.mxu0
  %v320 = vadd.f32 %v309, %v319
  %v321 = vpop.f32.mrf.mxu0
  %322 = vdwg.mxu0
  %v323 = vmax.f32 %v320, 0.0
  %v324 = vpack.c.bf16 %v307, %v307
  %v325 = vld [vmem:[#allocation3 + $0x10] sm:$0xff]
  %326 = vmatpush.bf16.msra.mxu0 %v285
  %327 = vmatpush.bf16.msra.mxu0 %v284
  %328 = vmatpush.bf16.msra.mxu0 %v283
  %329 = vmatpush.bf16.msra.mxu0 %v282
  %330 = vmatpush.bf16.msra.mxu0 %v281
  %331 = vmatpush.bf16.msra.mxu0 %v280
  %332 = vmatpush.bf16.msra.mxu0 %v279
  %333 = vmatpush.bf16.msra.mxu0 %v278
  %334 = vmatmul.bf16.gmra.mxu0 %v324
  %v335 = vpop.f32.mrf.mxu0
  %v336 = vadd.f32 %v325, %v335
  %v337 = vpop.f32.mrf.mxu0
  %338 = vdwg.mxu0
  %v339 = vmax.f32 %v336, 0.0
  %v340 = vpack.c.bf16 %v323, %v323
  %v341 = vld [vmem:[#allocation3 + $0x18] sm:$0xff]
  %342 = vmatpush.bf16.msra.mxu0 %v285
  %343 = vmatpush.bf16.msra.mxu0 %v284
  %344 = vmatpush.bf16.msra.mxu0 %v283
  %345 = vmatpush.bf16.msra.mxu0 %v282
  %346 = vmatpush.bf16.msra.mxu0 %v281
  %347 = vmatpush.bf16.msra.mxu0 %v280
  %348 = vmatpush.bf16.msra.mxu0 %v279
  %349 = vmatpush.bf16.msra.mxu0 %v278
  %350 = vmatmul.bf16.gmra.mxu0 %v340
  %v351 = vpop.f32.mrf.mxu0
  %v352 = vadd.f32 %v341, %v351
  %v353 = vpop.f32.mrf.mxu0
  %354 = vdwg.mxu0
  %v355 = vmax.f32 %v352, 0.0
  %v356 = vpack.c.bf16 %v339, %v339
  %v357 = vld [vmem:[#allocation3 + $0x20] sm:$0xff]
  %358 = vmatpush.bf16.msra.mxu0 %v285
  %359 = vmatpush.bf16.msra.mxu0 %v284
  %360 = vmatpush.bf16.msra.mxu0 %v283
  %361 = vmatpush.bf16.msra.mxu0 %v282
  %362 = vmatpush.bf16.msra.mxu0 %v281
  %363 = vmatpush.bf16.msra.mxu0 %v280
  %364 = vmatpush.bf16.msra.mxu0 %v279
  %365 = vmatpush.bf16.msra.mxu0 %v278
  %366 = vmatmul.bf16.gmra.mxu0 %v356
  %v367 = vpop.f32.mrf.mxu0
  %v368 = vadd.f32 %v357, %v367
  %v369 = vpop.f32.mrf.mxu0
  %370 = vdwg.mxu0
  %v371 = vmax.f32 %v368, 0.0
  %v372 = vpack.c.bf16 %v355, %v355
  %v373 = vld [vmem:[#allocation3 + $0x28] sm:$0xff]
  %374 = vmatpush.bf16.msra.mxu0 %v285
  %375 = vmatpush.bf16.msra.mxu0 %v284
  %376 = vmatpush.bf16.msra.mxu0 %v283
  %377 = vmatpush.bf16.msra.mxu0 %v282
  %378 = vmatpush.bf16.msra.mxu0 %v281
  %379 = vmatpush.bf16.msra.mxu0 %v280
  %380 = vmatpush.bf16.msra.mxu0 %v279
  %381 = vmatpush.bf16.msra.mxu0 %v278
  %382 = vmatmul.bf16.gmra.mxu0 %v372
  %v383 = vpop.f32.mrf.mxu0
  %v384 = vadd.f32 %v373, %v383
  %v385 = vpop.f32.mrf.mxu0
  %386 = vdwg.mxu0
  %v387 = vmax.f32 %v384, 0.0
  %v388 = vpack.c.bf16 %v371, %v371
  %v389 = vld [vmem:[#allocation3 + $0x30] sm:$0xff]
  %390 = vmatpush.bf16.msra.mxu0 %v285
  %391 = vmatpush.bf16.msra.mxu0 %v284
  %392 = vmatpush.bf16.msra.mxu0 %v283
  %393 = vmatpush.bf16.msra.mxu0 %v282
  %394 = vmatpush.bf16.msra.mxu0 %v281
  %395 = vmatpush.bf16.msra.mxu0 %v280
  %396 = vmatpush.bf16.msra.mxu0 %v279
  %397 = vmatpush.bf16.msra.mxu0 %v278
  %398 = vmatmul.bf16.gmra.mxu0 %v388
  %v399 = vpop.f32.mrf.mxu0
  %v400 = vadd.f32 %v389, %v399
  %v401 = vpop.f32.mrf.mxu0
  %402 = vdwg.mxu0
  %v403 = vmax.f32 %v400, 0.0
  %v404 = vpack.c.bf16 %v387, %v387
  %v405 = vld [vmem:[#allocation3 + $0x38] sm:$0xff]
  %406 = vmatpush.bf16.msra.mxu0 %v285
  %407 = vmatpush.bf16.msra.mxu0 %v284
  %408 = vmatpush.bf16.msra.mxu0 %v283
  %409 = vmatpush.bf16.msra.mxu0 %v282
  %410 = vmatpush.bf16.msra.mxu0 %v281
  %411 = vmatpush.bf16.msra.mxu0 %v280
  %412 = vmatpush.bf16.msra.mxu0 %v279
  %413 = vmatpush.bf16.msra.mxu0 %v278
  %414 = vmatmul.bf16.gmra.mxu0 %v404
  %v415 = vpop.f32.mrf.mxu0
  %v416 = vadd.f32 %v405, %v415
  %v417 = vpop.f32.mrf.mxu0
  %418 = vdwg.mxu0
  %v419 = vmax.f32 %v416, 0.0
  %v420 = vpack.c.bf16 %v403, %v403
  %v421 = vld [vmem:[#allocation3 + $0x40] sm:$0xff]
  %422 = vmatpush.bf16.msra.mxu0 %v285
  %423 = vmatpush.bf16.msra.mxu0 %v284
  %424 = vmatpush.bf16.msra.mxu0 %v283
  %425 = vmatpush.bf16.msra.mxu0 %v282
  %426 = vmatpush.bf16.msra.mxu0 %v281
  %427 = vmatpush.bf16.msra.mxu0 %v280
  %428 = vmatpush.bf16.msra.mxu0 %v279
  %429 = vmatpush.bf16.msra.mxu0 %v278
  %430 = vmatmul.bf16.gmra.mxu0 %v420
  %v431 = vpop.f32.mrf.mxu0
  %v432 = vadd.f32 %v421, %v431
  %v433 = vpop.f32.mrf.mxu0
  %434 = vdwg.mxu0
  %v435 = vmax.f32 %v432, 0.0
  %v436 = vpack.c.bf16 %v419, %v419
  %v437 = vld [vmem:[#allocation3 + $0x48] sm:$0xff]
  %438 = vmatpush.bf16.msra.mxu0 %v285
  %439 = vmatpush.bf16.msra.mxu0 %v284
  %440 = vmatpush.bf16.msra.mxu0 %v283
  %441 = vmatpush.bf16.msra.mxu0 %v282
  %442 = vmatpush.bf16.msra.mxu0 %v281
  %443 = vmatpush.bf16.msra.mxu0 %v280
  %444 = vmatpush.bf16.msra.mxu0 %v279
  %445 = vmatpush.bf16.msra.mxu0 %v278
  %446 = vmatmul.bf16.gmra.mxu0 %v436
  %v447 = vpop.f32.mrf.mxu0
  %v448 = vadd.f32 %v437, %v447
  %v449 = vpop.f32.mrf.mxu0
  %450 = vdwg.mxu0
  %v451 = vmax.f32 %v448, 0.0
  %v452 = vpack.c.bf16 %v435, %v435
  %v453 = vld [vmem:[#allocation3 + $0x50] sm:$0xff]
  %454 = vmatpush.bf16.msra.mxu0 %v285
  %455 = vmatpush.bf16.msra.mxu0 %v284
  %456 = vmatpush.bf16.msra.mxu0 %v283
  %457 = vmatpush.bf16.msra.mxu0 %v282
  %458 = vmatpush.bf16.msra.mxu0 %v281
  %459 = vmatpush.bf16.msra.mxu0 %v280
  %460 = vmatpush.bf16.msra.mxu0 %v279
  %461 = vmatpush.bf16.msra.mxu0 %v278
  %462 = vmatmul.bf16.gmra.mxu0 %v452
  %v463 = vpop.f32.mrf.mxu0
  %v464 = vadd.f32 %v453, %v463
  %v465 = vpop.f32.mrf.mxu0
  %466 = vdwg.mxu0
  %v467 = vmax.f32 %v464, 0.0
  %v468 = vpack.c.bf16 %v451, %v451
  %v469 = vld [vmem:[#allocation3 + $0x58] sm:$0xff]
  %470 = vmatpush.bf16.msra.mxu0 %v285
  %471 = vmatpush.bf16.msra.mxu0 %v284
  %472 = vmatpush.bf16.msra.mxu0 %v283
  %473 = vmatpush.bf16.msra.mxu0 %v282
  %474 = vmatpush.bf16.msra.mxu0 %v281
  %475 = vmatpush.bf16.msra.mxu0 %v280
  %476 = vmatpush.bf16.msra.mxu0 %v279
  %477 = vmatpush.bf16.msra.mxu0 %v278
  %478 = vmatmul.bf16.gmra.mxu0 %v468
  %v479 = vpop.f32.mrf.mxu0
  %v480 = vadd.f32 %v469, %v479
  %v481 = vpop.f32.mrf.mxu0
  %482 = vdwg.mxu0
  %v483 = vmax.f32 %v480, 0.0
  %v484 = vpack.c.bf16 %v467, %v467
  %v485 = vld [vmem:[#allocation3 + $0x60] sm:$0xff]
  %486 = vmatpush.bf16.msra.mxu0 %v285
  %487 = vmatpush.bf16.msra.mxu0 %v284
  %488 = vmatpush.bf16.msra.mxu0 %v283
  %489 = vmatpush.bf16.msra.mxu0 %v282
  %490 = vmatpush.bf16.msra.mxu0 %v281
  %491 = vmatpush.bf16.msra.mxu0 %v280
  %492 = vmatpush.bf16.msra.mxu0 %v279
  %493 = vmatpush.bf16.msra.mxu0 %v278
  %494 = vmatmul.bf16.gmra.mxu0 %v484
  %v495 = vpop.f32.mrf.mxu0
  %v496 = vadd.f32 %v485, %v495
  %v497 = vpop.f32.mrf.mxu0
  %498 = vdwg.mxu0
  %v499 = vmax.f32 %v496, 0.0
  %v500 = vpack.c.bf16 %v483, %v483
  %v501 = vld [vmem:[#allocation3 + $0x68] sm:$0xff]
  %502 = vmatpush.bf16.msra.mxu0 %v285
  %503 = vmatpush.bf16.msra.mxu0 %v284
  %504 = vmatpush.bf16.msra.mxu0 %v283
  %505 = vmatpush.bf16.msra.mxu0 %v282
  %506 = vmatpush.bf16.msra.mxu0 %v281
  %507 = vmatpush.bf16.msra.mxu0 %v280
  %508 = vmatpush.bf16.msra.mxu0 %v279
  %509 = vmatpush.bf16.msra.mxu0 %v278
  %510 = vmatmul.bf16.gmra.mxu0 %v500
  %v511 = vpop.f32.mrf.mxu0
  %v512 = vadd.f32 %v501, %v511
  %v513 = vpop.f32.mrf.mxu0
  %514 = vdwg.mxu0
  %v515 = vmax.f32 %v512, 0.0
  %v516 = vpack.c.bf16 %v499, %v499
  %v517 = vld [vmem:[#allocation3 + $0x70] sm:$0xff]
  %518 = vmatpush.bf16.msra.mxu0 %v285
  %519 = vmatpush.bf16.msra.mxu0 %v284
  %520 = vmatpush.bf16.msra.mxu0 %v283
  %521 = vmatpush.bf16.msra.mxu0 %v282
  %522 = vmatpush.bf16.msra.mxu0 %v281
  %523 = vmatpush.bf16.msra.mxu0 %v280
  %524 = vmatpush.bf16.msra.mxu0 %v279
  %525 = vmatpush.bf16.msra.mxu0 %v278
  %526 = vmatmul.bf16.gmra.mxu0 %v516
  %v527 = vpop.f32.mrf.mxu0
  %v528 = vadd.f32 %v517, %v527
  %v529 = vpop.f32.mrf.mxu0
  %530 = vdwg.mxu0
  %v531 = vmax.f32 %v528, 0.0
  %v532 = vpack.c.bf16 %v515, %v515
  %v533 = vld [vmem:[#allocation3 + $0x78] sm:$0xff]
  %534 = vmatpush.bf16.msra.mxu0 %v285
  %535 = vmatpush.bf16.msra.mxu0 %v284
  %536 = vmatpush.bf16.msra.mxu0 %v283
  %537 = vmatpush.bf16.msra.mxu0 %v282
  %538 = vmatpush.bf16.msra.mxu0 %v281
  %539 = vmatpush.bf16.msra.mxu0 %v280
  %540 = vmatpush.bf16.msra.mxu0 %v279
  %541 = vmatpush.bf16.msra.mxu0 %v278
  %542 = vmatmul.bf16.gmra.mxu0 %v532
  %v543 = vpop.f32.mrf.mxu0
  %v544 = vadd.f32 %v533, %v543
  %v545 = vpop.f32.mrf.mxu0
  %546 = vdwg.mxu0
  %v547 = vmax.f32 %v544, 0.0
  %548 = vst [vmem:[#allocation2] sm:$0xff] %v531
  %549 = vst [vmem:[#allocation2 + $0x8] sm:$0xff] %v547
  // Predicated region
  $region30: #{forward.1} parent=0 // pred_check
    %p550 = pneg %p23
  $region31: #{forward.1} parent=0 // pred_check_branch
    %552 = sbr.rel (%p550) target = $region33
  $region32: #{forward.1} parent=0 // pred_region
    %v553 = vld [vmem:[#allocation2] sm:$0xff]
    %v554 = vld [vmem:[#allocation2 + $0x8] sm:$0xff]
    %v555 = vpack.c.bf16 %v554, %v553
    %v556 = vld [vmem:[%s4] sm:$0xf]
    %v557 = vld [vmem:[%s4 + $0x4] sm:$0xf]
    %v558 = vld [vmem:[%s4 + $0x8] sm:$0xf]
    %v559 = vld [vmem:[%s4 + $0xc] sm:$0xf]
    %v560 = vld [vmem:[%s4 + $0x10] sm:$0xf]
    %v561 = vld [vmem:[%s4 + $0x14] sm:$0xf]
    %v562 = vld [vmem:[%s4 + $0x18] sm:$0xf]
    %v563 = vld [vmem:[%s4 + $0x1c] sm:$0xf]
    %v564 = vld [vmem:[%s4 + $0x20] sm:$0xf]
    %v565 = vld [vmem:[%s4 + $0x24] sm:$0xf]
    %v566 = vld [vmem:[%s4 + $0x28] sm:$0xf]
    %v567 = vld [vmem:[%s4 + $0x2c] sm:$0xf]
    %v568 = vld [vmem:[%s4 + $0x30] sm:$0xf]
    %v569 = vld [vmem:[%s4 + $0x34] sm:$0xf]
    %v570 = vld [vmem:[%s4 + $0x38] sm:$0xf]
    %v571 = vld [vmem:[%s4 + $0x3c] sm:$0xf]
    %v572 = vld [vmem:[%s5] sm:$0x1]
    %v574 = vperm.slane %v572, 0
    %v592 = vunpack.c.l.b16 %v556
    %v593 = vunpack.c.l.b16 %v557
    %v594 = vunpack.c.l.b16 %v558
    %v595 = vunpack.c.l.b16 %v559
    %v596 = vunpack.c.l.b16 %v560
    %v597 = vunpack.c.l.b16 %v561
    %v598 = vunpack.c.l.b16 %v562
    %v599 = vunpack.c.l.b16 %v563
    %v600 = vunpack.c.l.b16 %v564
    %v601 = vunpack.c.l.b16 %v565
    %v602 = vunpack.c.l.b16 %v566
    %v603 = vunpack.c.l.b16 %v567
    %v604 = vunpack.c.l.b16 %v568
    %v605 = vunpack.c.l.b16 %v569
    %v606 = vunpack.c.l.b16 %v570
    %v607 = vunpack.c.l.b16 %v571
    %v608 = vpack.c.b16 %v593, %v592
    %v609 = vpack.c.b16 %v595, %v594
    %v610 = vpack.c.b16 %v597, %v596
    %v611 = vpack.c.b16 %v599, %v598
    %v612 = vpack.c.b16 %v601, %v600
    %v613 = vpack.c.b16 %v603, %v602
    %v614 = vpack.c.b16 %v605, %v604
    %v615 = vpack.c.b16 %v607, %v606
    %624 = vmatpush.bf16.msra.mxu0 %v615
    %625 = vmatpush.bf16.msra.mxu0 %v614
    %626 = vmatpush.bf16.msra.mxu0 %v613
    %627 = vmatpush.bf16.msra.mxu0 %v612
    %628 = vmatpush.bf16.msra.mxu0 %v611
    %629 = vmatpush.bf16.msra.mxu0 %v610
    %630 = vmatpush.bf16.msra.mxu0 %v609
    %631 = vmatpush.bf16.msra.mxu0 %v608
    %632 = vmatmul.bf16.gmra.mxu0 %v555
    %v633 = vpop.f32.mrf.mxu0
    %v634 = vadd.f32 %v574, %v633
    %v635 = vpop.f32.mrf.mxu0
    %v636 = vadd.f32 %v574, %v635
    %637 = vdwg.mxu0
    %638 = vst [vmem:[%s6] sm:$0xff] %v634
    %639 = vst [vmem:[%s6 + $0x8] sm:$0xff] %v636
  $region33: #{forward.1} parent=0 // pred_fallthru
    _
  // Predicated region
  $region34: #{forward.1} parent=0 // pred_check
    _
  $region35: #{forward.1} parent=0 // pred_check_branch
    %641 = sbr.rel (0) target = $region37
  $region36: #{forward.1} parent=0 // pred_region
    _
  $region37: #{forward.1} parent=0 // pred_fallthru
    _
  // Predicated region
  $region38: #{forward.1} parent=0 // pred_check
    _
  $region39: #{forward.1} parent=0 // pred_check_branch
    %643 = sbr.rel (0) target = $region41
  $region40: #{forward.1} parent=0 // pred_region
    _
  $region41: #{forward.1} parent=0 // pred_fallthru
    _

</llo_original>
